<compile_context>
chip_gen: v7x
topology: tpu7x:2x2x1
jax: 0.10.0
libtpu: 0.0.40
codegen_flags: <defaults>
</compile_context>

<pallas_src>
import numpy as np
import jax
import jax.numpy as jnp
from jax import lax
from jax.experimental import pallas as pl
from jax.experimental.pallas import tpu as pltpu


def _round_up(x, m):
    return ((x + m - 1) // m) * m


# ---------------------------------------------------------------------------
# Kernel 1: cotangent edge weights (elementwise over faces, lane-dense layout)
# ---------------------------------------------------------------------------
def _cot_kernel(v1_ref, v2_ref, v3_ref, c_ref):
    # v*_ref: (3, tile) float32 — rows = xyz, lanes = faces
    v1 = v1_ref[...]
    v2 = v2_ref[...]
    v3 = v3_ref[...]

    d1 = v2 - v3
    d2 = v3 - v1
    d3 = v1 - v2
    l1sq = jnp.sum(d1 * d1, axis=0, keepdims=True)  # (1, tile)
    l2sq = jnp.sum(d2 * d2, axis=0, keepdims=True)
    l3sq = jnp.sum(d3 * d3, axis=0, keepdims=True)
    l1 = jnp.sqrt(l1sq)
    l2 = jnp.sqrt(l2sq)
    l3 = jnp.sqrt(l3sq)
    sp = (l1 + l2 + l3) * 0.5
    area_arg = sp * (sp - l1) * (sp - l2) * (sp - l3)
    # Reference: A = 2*sqrt(area_arg); A[A<=0]=1; A[A!=A]=1; cot = (...)/A/4.
    # 1/(4A) = 0.125 * rsqrt(area_arg) when area_arg > 0, else 0.25 (A == 1).
    inv4A = jnp.where(area_arg > 0.0, 0.125 * lax.rsqrt(area_arg), 0.25)

    c_ref[0:1, :] = (l2sq + l3sq - l1sq) * inv4A   # cot23  (edge f1-f2)
    c_ref[1:2, :] = (l1sq + l3sq - l2sq) * inv4A   # cot31  (edge f2-f0)
    c_ref[2:3, :] = (l1sq + l2sq - l3sq) * inv4A   # cot12  (edge f0-f1)


# ---------------------------------------------------------------------------
# Kernel 2: bucketed one-hot MXU scatter + symmetrization + diagonal
# ---------------------------------------------------------------------------
def _laplacian_kernel(off_ref, cnt_ref, fl_ref, fs_ref, w_ref, out_ref, rs_ref):
    # off_ref: (n_row_tiles,) int32 SMEM — face-tile offset of row tile i's bucket
    # cnt_ref: (n_row_tiles,) int32 SMEM — #face tiles in row tile i's bucket (>=1)
    # fl_ref : (3, tk)  int32   bucketed face indices, faces along lanes (rows f0,f1,f2)
    # fs_ref : (tk, 3)  int32   bucketed face indices, faces along sublanes
    # w_ref  : (3, tk)  float32 rows = [cot23, cot31, cot12] (0 on padded faces)
    # out_ref: (tm, tn) float32 output tile (accumulates S across k, finalized at end)
    # rs_ref : (tm, 1)  float32 row-sum accumulator (used only on diagonal tiles)
    i = pl.program_id(0)
    j = pl.program_id(1)
    k = pl.program_id(2)
    nk = pl.num_programs(2)
    tm, tn = out_ref.shape
    tk = fl_ref.shape[1]

    @pl.when(k == 0)
    def _():
        out_ref[...] = jnp.zeros_like(out_ref)
        rs_ref[...] = jnp.zeros_like(rs_ref)

    # Only process real face tiles of this row tile's bucket (index_map clamps
    # k past the bucket to the last tile, so this guard also prevents
    # double-counting the clamped block).
    @pl.when(k < cnt_ref[i])
    def _():
        fl = fl_ref[...]
        fs = fs_ref[...]
        w = w_ref[...]
        base_r = i * tm
        base_c = j * tn

        w23 = w[0:1, :]
        w31 = w[1:2, :]
        w12 = w[2:3, :]

        # Shared row compares (padded faces have index -1 -> never match).
        row_iota = lax.broadcasted_iota(jnp.int32, (tm, tk), 0) + base_r
        eq0 = row_iota == fl[0:1, :]
        eq1 = row_iota == fl[1:2, :]
        eq2 = row_iota == fl[2:3, :]

        zero = jnp.float32(0.0)
        # S = W + W^T contributions grouped by the column one-hot they pair with:
        #   col f0: S[f2,f0] += cot31,  S[f1,f0] += cot12
        #   col f1: S[f0,f1] += cot12,  S[f2,f1] += cot23
        #   col f2: S[f1,f2] += cot23,  S[f0,f2] += cot31
        L0 = jnp.where(eq2, w31, zero) + jnp.where(eq1, w12, zero)
        L1 = jnp.where(eq0, w12, zero) + jnp.where(eq2, w23, zero)
        L2 = jnp.where(eq1, w23, zero) + jnp.where(eq0, w31, zero)

        # Column one-hots (tk, tn), exact 0/1 in bf16.
        col_iota = lax.broadcasted_iota(jnp.int32, (tk, tn), 1) + base_c
        ohc0 = (col_iota == fs[:, 0:1]).astype(jnp.bfloat16)
        ohc1 = (col_iota == fs[:, 1:2]).astype(jnp.bfloat16)
        ohc2 = (col_iota == fs[:, 2:3]).astype(jnp.bfloat16)

        # bf16 hi/lo split of the weighted LHS (exact to ~f32), f32 MXU accumulate.
        def hilo_dot(lterm, ohc):
            hi = lterm.astype(jnp.bfloat16)
            lo = (lterm - hi.astype(jnp.float32)).astype(jnp.bfloat16)
            return (jnp.dot(hi, ohc, preferred_element_type=jnp.float32)
                    + jnp.dot(lo, ohc, preferred_element_type=jnp.float32))

        acc = hilo_dot(L0, ohc0) + hilo_dot(L1, ohc1) + hilo_dot(L2, ohc2)
        out_ref[...] += acc

        # Row sums of S only needed on diagonal tiles; the row-bucket faces are
        # exactly the faces contributing to rows of tile i, independent of j.
        @pl.when(i == j)
        def _():
            rs_ref[...] += jnp.sum(L0 + L1 + L2, axis=1, keepdims=True)

    @pl.when(k == nk - 1)
    def _():
        @pl.when(i == j)
        def _():
            ridx = lax.broadcasted_iota(jnp.int32, (tm, tn), 0)
            cidx = lax.broadcasted_iota(jnp.int32, (tm, tn), 1)
            out_ref[...] = jnp.where(ridx == cidx,
                                     rs_ref[...] - out_ref[...],
                                     -out_ref[...])

        @pl.when(i != j)
        def _():
            out_ref[...] = -out_ref[...]


# ---------------------------------------------------------------------------
# Host-side per-row-tile face bucketing
# ---------------------------------------------------------------------------
def _build_buckets(F_np, n_row_tiles, tm, tk):
    """Group faces by the row tiles they touch (deduped per face).

    Returns:
      perm      : (Tb,) int64 — bucketed face ids, -1 for padding; each bucket
                  padded to a multiple of tk faces (>= 1 tile per bucket).
      off_tiles : (n_row_tiles,) int32 — face-tile offset of each bucket.
      cnt_tiles : (n_row_tiles,) int32 — #face tiles per bucket (>= 1).
      nk        : int — max(cnt_tiles), the static k extent of the grid.
    """
    Fn = F_np.shape[0]
    tiles = (F_np // tm).astype(np.int64)                 # (Fn, 3)
    keep = np.ones_like(tiles, dtype=bool)
    keep[:, 1] = tiles[:, 1] != tiles[:, 0]
    keep[:, 2] = (tiles[:, 2] != tiles[:, 0]) & (tiles[:, 2] != tiles[:, 1])
    fids = np.broadcast_to(np.arange(Fn)[:, None], (Fn, 3))[keep]
    tids = tiles[keep]

    counts = np.bincount(tids, minlength=n_row_tiles)     # faces per bucket
    cnt_tiles = np.maximum((counts + tk - 1) // tk, 1).astype(np.int32)
    off_tiles = np.zeros(n_row_tiles, np.int32)
    off_tiles[1:] = np.cumsum(cnt_tiles)[:-1]

    Tb = int(cnt_tiles.sum()) * tk
    perm = np.full(Tb, -1, dtype=np.int64)
    order = np.argsort(tids, kind="stable")
    sorted_fids = fids[order]
    sorted_tids = tids[order]
    cum_before = np.zeros(n_row_tiles, np.int64)
    cum_before[1:] = np.cumsum(counts)[:-1]
    within = np.arange(len(sorted_fids), dtype=np.int64) - cum_before[sorted_tids]
    perm[off_tiles.astype(np.int64)[sorted_tids] * tk + within] = sorted_fids
    return perm, off_tiles, cnt_tiles, int(cnt_tiles.max())


# ---------------------------------------------------------------------------
# Wrapper
# ---------------------------------------------------------------------------
def laplacian(V, F, *, tile_n=512, tile_f=512):
    """V: (N, 3) float32 vertices; F: (Fn, 3) int32 faces -> (N, N) float32."""
    assert tile_n % 128 == 0 and tile_f % 128 == 0
    V = jnp.asarray(V, jnp.float32)
    F = jnp.asarray(F, jnp.int32)
    N = int(V.shape[0])
    Fn = int(F.shape[0])

    tm = tn = tile_n
    tk = tile_f
    Np = _round_up(max(N, 1), tm)
    n_row_tiles = Np // tm

    # ---- Kernel 1: cotangent weights, lane-dense (3, Fp) layout -------------
    FTILE = 512
    Fp = _round_up(max(Fn, 1), FTILE)
    padf = ((0, 0), (0, Fp - Fn))
    # Padded faces are degenerate (zero vertices) => weights exactly 0.
    v1 = jnp.pad(jnp.take(V, F[:, 0], axis=0).T, padf)
    v2 = jnp.pad(jnp.take(V, F[:, 1], axis=0).T, padf)
    v3 = jnp.pad(jnp.take(V, F[:, 2], axis=0).T, padf)

    cot = pl.pallas_call(
        _cot_kernel,
        out_shape=jax.ShapeDtypeStruct((3, Fp), jnp.float32),
        grid=(Fp // FTILE,),
        in_specs=[pl.BlockSpec((3, FTILE), lambda c: (0, c))] * 3,
        out_specs=pl.BlockSpec((3, FTILE), lambda c: (0, c)),
        compiler_params=pltpu.CompilerParams(
            dimension_semantics=("parallel",)),
    )(v1, v2, v3)

    # ---- Host-side per-row-tile face bucketing (scalar-prefetch schedule) ---
    # TODO(synk): host bucketing means `laplacian` is not jittable end-to-end;
    # for a fixed mesh topology precompute (perm, offsets, counts) once.
    F_np = np.asarray(F)
    perm, off_tiles, cnt_tiles, nk = _build_buckets(F_np, n_row_tiles, tm, tk)

    perm_j = jnp.asarray(perm, jnp.int32)              # (Tb,), -1 = padding
    safe = jnp.maximum(perm_j, 0)
    valid_l = (perm_j >= 0)[None, :]
    valid_s = (perm_j >= 0)[:, None]
    fl_b = jnp.where(valid_l, jnp.take(F.T, safe, axis=1), -1)      # (3, Tb)
    fs_b = jnp.where(valid_s, jnp.take(F, safe, axis=0), -1)        # (Tb, 3)
    cot_b = jnp.where(valid_l, jnp.take(cot, safe, axis=1), 0.0)    # (3, Tb)

    off_j = jnp.asarray(off_tiles, jnp.int32)
    cnt_j = jnp.asarray(cnt_tiles, jnp.int32)

    def face_map(i, j, k, off, cnt):
        # Clamp past-the-bucket k to the last valid tile; kernel skips it.
        return off[i] + jnp.minimum(k, cnt[i] - 1)

    grid = (Np // tm, Np // tn, nk)
    out_padded = pl.pallas_call(
        _laplacian_kernel,
        out_shape=jax.ShapeDtypeStruct((Np, Np), jnp.float32),
        grid_spec=pltpu.PrefetchScalarGridSpec(
            num_scalar_prefetch=2,
            grid=grid,
            in_specs=[
                pl.BlockSpec((3, tk),
                             lambda i, j, k, off, cnt: (0, face_map(i, j, k, off, cnt))),
                pl.BlockSpec((tk, 3),
                             lambda i, j, k, off, cnt: (face_map(i, j, k, off, cnt), 0)),
                pl.BlockSpec((3, tk),
                             lambda i, j, k, off, cnt: (0, face_map(i, j, k, off, cnt))),
            ],
            out_specs=pl.BlockSpec((tm, tn), lambda i, j, k, off, cnt: (i, j)),
            scratch_shapes=[
                pltpu.VMEM((tm, 1), jnp.float32),    # row-sum accumulator
            ],
        ),
        compiler_params=pltpu.CompilerParams(
            dimension_semantics=("parallel", "parallel", "arbitrary"),
            vmem_limit_bytes=48 * 1024 * 1024,
        ),
    )(off_j, cnt_j, fl_b, fs_b, cot_b)

    return out_padded[:N, :N]


# ---------------------------------------------------------------------------
# Reference (float64 numpy, mirrors the PyTorch/scipy module)
# ---------------------------------------------------------------------------
def _reference_numpy(V, F):
    V = np.asarray(V, dtype=np.float64)
    F = np.asarray(F, dtype=np.int64)
    N = V.shape[0]
    v1, v2, v3 = V[F[:, 0]], V[F[:, 1]], V[F[:, 2]]
    l1 = np.sqrt(((v2 - v3) ** 2).sum(1))
    l2 = np.sqrt(((v3 - v1) ** 2).sum(1))
    l3 = np.sqrt(((v1 - v2) ** 2).sum(1))
    sp = (l1 + l2 + l3) * 0.5
    with np.errstate(invalid="ignore"):
        A = 2.0 * np.sqrt(sp * (sp - l1) * (sp - l2) * (sp - l3))
    A[A <= 0] = 1.0
    A[np.isnan(A)] = 1.0
    cot23 = (l2 ** 2 + l3 ** 2 - l1 ** 2) / A / 4.0
    cot31 = (l1 ** 2 + l3 ** 2 - l2 ** 2) / A / 4.0
    cot12 = (l1 ** 2 + l2 ** 2 - l3 ** 2) / A / 4.0
    W = np.zeros((N, N), dtype=np.float64)
    np.add.at(W, (F[:, 1], F[:, 2]), cot23)
    np.add.at(W, (F[:, 2], F[:, 0]), cot31)
    np.add.at(W, (F[:, 0], F[:, 1]), cot12)
    S = W + W.T
    return np.diag(S.sum(1)) - S


if __name__ == "__main__":
    key = jax.random.PRNGKey(0)

    def check(n_verts, n_faces, tile_n, tile_f, k, max_vert=None):
        kv, kf = jax.random.split(k)
        hi = n_verts if max_vert is None else max_vert
        V = jax.random.normal(kv, (n_verts, 3), dtype=jnp.float32)
        F = jax.random.randint(kf, (n_faces, 3), 0, hi, dtype=jnp.int32)
        L = jax.block_until_ready(laplacian(V, F, tile_n=tile_n, tile_f=tile_f))
        L_ref = _reference_numpy(np.asarray(V), np.asarray(F))
        np.testing.assert_allclose(np.asarray(L), L_ref, rtol=1e-3, atol=1e-3)

    k1, k2, k3 = jax.random.split(key, 3)
    check(32, 48, 512, 512, k1)              # single-tile grid (1,1,1)
    check(300, 800, 128, 128, k2)            # multi-tile grid, bucketed k axis
    check(260, 64, 128, 128, k3, max_vert=100)  # empty buckets / sentinel tiles
    print("KERNEL_OK")
</pallas_src>

<mosaic_0001>
module attributes {stable_mosaic.version = 11 : i64} {
  func.func @_cot_kernel(%arg0: i32, %arg1: memref<3x512xf32, #tpu.memory_space<vmem>>, %arg2: memref<3x512xf32, #tpu.memory_space<vmem>>, %arg3: memref<3x512xf32, #tpu.memory_space<vmem>>, %arg4: memref<3x512xf32, #tpu.memory_space<vmem>>) attributes {dimension_semantics = [#tpu.dimension_semantics<parallel>], iteration_bounds = array<i64: 1>, scalar_prefetch = 0 : i64, scratch_operands = 0 : i64, tpu.core_type = #tpu.core_type<tc>, window_params = [{transform_indices = @transform_0, window_bounds = array<i64: 3, 512>}, {transform_indices = @transform_1, window_bounds = array<i64: 3, 512>}, {transform_indices = @transform_2, window_bounds = array<i64: 3, 512>}, {transform_indices = @transform_3, window_bounds = array<i64: 3, 512>}]} {
    %c0 = arith.constant 0 : index
    %c0_0 = arith.constant 0 : index
    %0 = vector.load %arg1[%c0, %c0_0] : memref<3x512xf32, #tpu.memory_space<vmem>>, vector<3x512xf32>
    %c0_1 = arith.constant 0 : index
    %c0_2 = arith.constant 0 : index
    %1 = vector.load %arg2[%c0_1, %c0_2] : memref<3x512xf32, #tpu.memory_space<vmem>>, vector<3x512xf32>
    %c0_3 = arith.constant 0 : index
    %c0_4 = arith.constant 0 : index
    %2 = vector.load %arg3[%c0_3, %c0_4] : memref<3x512xf32, #tpu.memory_space<vmem>>, vector<3x512xf32>
    %3 = arith.subf %1, %2 : vector<3x512xf32>
    %4 = arith.subf %2, %0 : vector<3x512xf32>
    %5 = arith.subf %0, %1 : vector<3x512xf32>
    %6 = arith.mulf %3, %3 : vector<3x512xf32>
    %cst = arith.constant dense<0.000000e+00> : vector<512xf32>
    %7 = vector.multi_reduction <add>, %6, %cst [0] : vector<3x512xf32> to vector<512xf32>
    %8 = vector.shape_cast %7 : vector<512xf32> to vector<1x512xf32>
    %9 = arith.mulf %4, %4 : vector<3x512xf32>
    %cst_5 = arith.constant dense<0.000000e+00> : vector<512xf32>
    %10 = vector.multi_reduction <add>, %9, %cst_5 [0] : vector<3x512xf32> to vector<512xf32>
    %11 = vector.shape_cast %10 : vector<512xf32> to vector<1x512xf32>
    %12 = arith.mulf %5, %5 : vector<3x512xf32>
    %cst_6 = arith.constant dense<0.000000e+00> : vector<512xf32>
    %13 = vector.multi_reduction <add>, %12, %cst_6 [0] : vector<3x512xf32> to vector<512xf32>
    %14 = vector.shape_cast %13 : vector<512xf32> to vector<1x512xf32>
    %15 = math.sqrt %8 : vector<1x512xf32>
    %16 = math.sqrt %11 : vector<1x512xf32>
    %17 = math.sqrt %14 : vector<1x512xf32>
    %18 = arith.addf %15, %16 : vector<1x512xf32>
    %19 = arith.addf %18, %17 : vector<1x512xf32>
    %cst_7 = arith.constant 5.000000e-01 : f32
    %20 = vector.broadcast %cst_7 : f32 to vector<1x512xf32>
    %21 = arith.mulf %19, %20 : vector<1x512xf32>
    %22 = arith.subf %21, %15 : vector<1x512xf32>
    %23 = arith.mulf %21, %22 : vector<1x512xf32>
    %24 = arith.subf %21, %16 : vector<1x512xf32>
    %25 = arith.mulf %23, %24 : vector<1x512xf32>
    %26 = arith.subf %21, %17 : vector<1x512xf32>
    %27 = arith.mulf %25, %26 : vector<1x512xf32>
    %cst_8 = arith.constant 0.000000e+00 : f32
    %28 = vector.broadcast %cst_8 : f32 to vector<1x512xf32>
    %29 = arith.cmpf ogt, %27, %28 : vector<1x512xf32>
    %30 = math.rsqrt %27 : vector<1x512xf32>
    %cst_9 = arith.constant 1.250000e-01 : f32
    %31 = vector.broadcast %cst_9 : f32 to vector<1x512xf32>
    %32 = arith.mulf %31, %30 : vector<1x512xf32>
    %cst_10 = arith.constant 2.500000e-01 : f32
    %33 = vector.broadcast %cst_10 : f32 to vector<1x512xf32>
    %34 = arith.select %29, %32, %33 : vector<1x512xi1>, vector<1x512xf32>
    %35 = arith.addf %11, %14 : vector<1x512xf32>
    %36 = arith.subf %35, %8 : vector<1x512xf32>
    %37 = arith.mulf %36, %34 : vector<1x512xf32>
    %c0_11 = arith.constant 0 : index
    %c0_12 = arith.constant 0 : index
    %38 = vector.load %arg4[%c0_11, %c0_12] : memref<3x512xf32, #tpu.memory_space<vmem>>, vector<1x512xf32>
    tpu.vector_store %arg4[%c0_11, %c0_12], %37 {strides = array<i32>} : memref<3x512xf32, #tpu.memory_space<vmem>>, vector<1x512xf32>,
    %39 = arith.addf %8, %14 : vector<1x512xf32>
    %40 = arith.subf %39, %11 : vector<1x512xf32>
    %41 = arith.mulf %40, %34 : vector<1x512xf32>
    %c1 = arith.constant 1 : index
    %c0_13 = arith.constant 0 : index
    %42 = vector.load %arg4[%c1, %c0_13] : memref<3x512xf32, #tpu.memory_space<vmem>>, vector<1x512xf32>
    tpu.vector_store %arg4[%c1, %c0_13], %41 {strides = array<i32>} : memref<3x512xf32, #tpu.memory_space<vmem>>, vector<1x512xf32>,
    %43 = arith.addf %8, %11 : vector<1x512xf32>
    %44 = arith.subf %43, %14 : vector<1x512xf32>
    %45 = arith.mulf %44, %34 : vector<1x512xf32>
    %c2 = arith.constant 2 : index
    %c0_14 = arith.constant 0 : index
    %46 = vector.load %arg4[%c2, %c0_14] : memref<3x512xf32, #tpu.memory_space<vmem>>, vector<1x512xf32>
    tpu.vector_store %arg4[%c2, %c0_14], %45 {strides = array<i32>} : memref<3x512xf32, #tpu.memory_space<vmem>>, vector<1x512xf32>,
    return
  }
  func.func @transform_0(%arg0: i32) -> (i32, i32) {
    %c0_i32 = arith.constant 0 : i32
    %c0_i32_0 = arith.constant 0 : i32
    return %c0_i32, %arg0 : i32, i32
  }
  func.func @transform_1(%arg0: i32) -> (i32, i32) {
    %c0_i32 = arith.constant 0 : i32
    %c0_i32_0 = arith.constant 0 : i32
    return %c0_i32, %arg0 : i32, i32
  }
  func.func @transform_2(%arg0: i32) -> (i32, i32) {
    %c0_i32 = arith.constant 0 : i32
    %c0_i32_0 = arith.constant 0 : i32
    return %c0_i32, %arg0 : i32, i32
  }
  func.func @transform_3(%arg0: i32) -> (i32, i32) {
    %c0_i32 = arith.constant 0 : i32
    %c0_i32_0 = arith.constant 0 : i32
    return %c0_i32, %arg0 : i32, i32
  }
}

</mosaic_0001>

<llo_original>
// kernel: tpu_custom_call.1
$region0: #{tpu_custom_call.1}
  #allocation0 [shape = 'u32[]', space=smem, size = 0x4, offset = 0x4, fixed_abs, tag = 'smem constant byte address 0x4 - core index']
  #allocation1 [shape = 'u32[144,128]{1,0:T(1,128)}', space=vmem, size = 0x12000, scoped, tag = 'internal scratch']
  %s0 = inlined_call_operand.hbm [shape: f32[3,512], index: 0, kind: input, shape index: {}]
  %s1 = inlined_call_operand.hbm [shape: f32[3,512], index: 1, kind: input, shape index: {}]
  %s2 = inlined_call_operand.hbm [shape: f32[3,512], index: 2, kind: input, shape index: {}]
  %s3 = inlined_call_operand.hbm [shape: f32[3,512], index: 3, kind: output, shape index: {}]
  %s4 = sld [smem:[#allocation0]]
  $region34: #{tpu_custom_call.1} parent=0
    _
  %s6 = ssub.s32 1, %s4
  %s7 = scalar_select 0, %s6, %s4
  $region1: #{tpu_custom_call.1} parent=0
    #allocation2 [shape = 'u8[8192]{0}', space=vmem, size = 0x2000, scoped, tag = 'input window, operand 0, single buffered']
    #allocation3 [shape = 's32[1]{0}', space=sflag, size = 0x4, scoped, tag = 'scoped memory for tpu_custom_call.1']
    #allocation4 [shape = 's32[1]{0}', space=sflag, size = 0x4, scoped, tag = 'scoped memory for tpu_custom_call.1']
    #allocation5 [shape = 'u8[8192]{0}', space=vmem, size = 0x2000, scoped, tag = 'input window, operand 1, single buffered']
    #allocation6 [shape = 's32[1]{0}', space=sflag, size = 0x4, scoped, tag = 'scoped memory for tpu_custom_call.1']
    #allocation7 [shape = 'u8[8192]{0}', space=vmem, size = 0x2000, scoped, tag = 'input window, operand 2, single buffered']
    #allocation8 [shape = 'u8[8192]{0}', space=vmem, size = 0x2000, scoped, tag = 'output window, operand 0, single buffered']
    %8 = vsyncpa [#allocation3], 0
    %9 = vsyncpa [#allocation6], 0
    %10 = vsyncpa [#allocation4], 0
    // Predicated region
    $region2: #{tpu_custom_call.1} parent=1 // pred_check
      _
    $region3: #{tpu_custom_call.1} parent=1 // pred_check_branch
      %12 = sbr.rel (0) target = $region5
    $region4: #{tpu_custom_call.1} parent=1 // pred_region
      %s14 = ssub.s32 256, 256
      %15 = vsyncadd [#allocation3], %s14
      %s17 = sshll.u32 [#allocation2], 4
      %s18 = int_to_ptr.vmem [resolvable:$true] %s17
      %20 = dma.hbm_to_vmem [thread:$0]  %s0, 256, %s18, [#allocation3]
    $region5: #{tpu_custom_call.1} parent=1 // pred_fallthru
      _
    // Predicated region
    $region6: #{tpu_custom_call.1} parent=1 // pred_check
      _
    $region7: #{tpu_custom_call.1} parent=1 // pred_check_branch
      %22 = sbr.rel (0) target = $region9
    $region8: #{tpu_custom_call.1} parent=1 // pred_region
      %s24 = ssub.s32 256, 256
      %25 = vsyncadd [#allocation6], %s24
      %s27 = sshll.u32 [#allocation5], 4
      %s28 = int_to_ptr.vmem [resolvable:$true] %s27
      %30 = dma.hbm_to_vmem [thread:$0]  %s1, 256, %s28, [#allocation6]
    $region9: #{tpu_custom_call.1} parent=1 // pred_fallthru
      _
    // Predicated region
    $region10: #{tpu_custom_call.1} parent=1 // pred_check
      _
    $region11: #{tpu_custom_call.1} parent=1 // pred_check_branch
      %32 = sbr.rel (0) target = $region13
    $region12: #{tpu_custom_call.1} parent=1 // pred_region
      %s34 = ssub.s32 256, 256
      %35 = vsyncadd [#allocation6], %s34
      %s37 = sshll.u32 [#allocation7], 4
      %s38 = int_to_ptr.vmem [resolvable:$true] %s37
      %40 = dma.hbm_to_vmem [thread:$0]  %s2, 256, %s38, [#allocation6]
    $region13: #{tpu_custom_call.1} parent=1 // pred_fallthru
      _
    // Predicated region
    $region14: #{tpu_custom_call.1} parent=1 // pred_check
      _
    $region15: #{tpu_custom_call.1} parent=1 // pred_check_branch
      %42 = sbr.rel (0) target = $region17
    $region16: #{tpu_custom_call.1} parent=1 // pred_region
      %43 = dma.done [#allocation3], 256
    $region17: #{tpu_custom_call.1} parent=1 // pred_fallthru
      _
    // Predicated region
    $region18: #{tpu_custom_call.1} parent=1 // pred_check
      _
    $region19: #{tpu_custom_call.1} parent=1 // pred_check_branch
      %45 = sbr.rel (0) target = $region21
    $region20: #{tpu_custom_call.1} parent=1 // pred_region
      %46 = dma.done [#allocation6], 256
    $region21: #{tpu_custom_call.1} parent=1 // pred_fallthru
      _
    // Predicated region
    $region22: #{tpu_custom_call.1} parent=1 // pred_check
      _
    $region23: #{tpu_custom_call.1} parent=1 // pred_check_branch
      %48 = sbr.rel (0) target = $region25
    $region24: #{tpu_custom_call.1} parent=1 // pred_region
      %49 = dma.done [#allocation6], 256
    $region25: #{tpu_custom_call.1} parent=1 // pred_fallthru
      _
    %v50 = vld [vmem:[#allocation2] sm:$0x77]
    %v51 = vld [vmem:[#allocation2 + $0x8] sm:$0x77]
    %v52 = vld [vmem:[#allocation5] sm:$0x77]
    %v53 = vld [vmem:[#allocation5 + $0x8] sm:$0x77]
    %v54 = vld [vmem:[#allocation7] sm:$0x77]
    %v55 = vld [vmem:[#allocation7 + $0x8] sm:$0x77]
    %v56 = vsub.f32 %v52, %v54
    %v57 = vsub.f32 %v53, %v55
    %v58 = vsub.f32 %v54, %v50
    %v59 = vsub.f32 %v55, %v51
    %v60 = vsub.f32 %v50, %v52
    %v61 = vsub.f32 %v51, %v53
    %v62 = vmul.f32 %v56, %v56
    %v63 = vmul.f32 %v57, %v57
    %v66 = vcombine.high %v62, %v62
    %v67 = vcombine.high %v63, %v63
    %vm70 = vcmask 1042432
    %v71 = vsel %vm70, %v62, 0.0
    %v72 = vrot.slane %v71, 4
    %v73 = vadd.f32 %v71, %v72
    %v74 = vrot.slane %v73, 2
    %v75 = vadd.f32 %v73, %v74
    %v76 = vrot.slane %v75, 1
    %v77 = vadd.f32 %v75, %v76
    %v78 = vsel %vm70, %v66, 0.0
    %v79 = vrot.slane %v78, 4
    %v80 = vadd.f32 %v78, %v79
    %v81 = vrot.slane %v80, 2
    %v82 = vadd.f32 %v80, %v81
    %v83 = vrot.slane %v82, 1
    %v84 = vadd.f32 %v82, %v83
    %v85 = vsel %vm70, %v63, 0.0
    %v86 = vrot.slane %v85, 4
    %v87 = vadd.f32 %v85, %v86
    %v88 = vrot.slane %v87, 2
    %v89 = vadd.f32 %v87, %v88
    %v90 = vrot.slane %v89, 1
    %v91 = vadd.f32 %v89, %v90
    %v92 = vsel %vm70, %v67, 0.0
    %v93 = vrot.slane %v92, 4
    %v94 = vadd.f32 %v92, %v93
    %v95 = vrot.slane %v94, 2
    %v96 = vadd.f32 %v94, %v95
    %v97 = vrot.slane %v96, 1
    %v98 = vadd.f32 %v96, %v97
    %v99 = vmul.f32 %v58, %v58
    %v100 = vmul.f32 %v59, %v59
    %v103 = vcombine.high %v99, %v99
    %v104 = vcombine.high %v100, %v100
    %v107 = vsel %vm70, %v99, 0.0
    %v108 = vrot.slane %v107, 4
    %v109 = vadd.f32 %v107, %v108
    %v110 = vrot.slane %v109, 2
    %v111 = vadd.f32 %v109, %v110
    %v112 = vrot.slane %v111, 1
    %v113 = vadd.f32 %v111, %v112
    %v114 = vsel %vm70, %v103, 0.0
    %v115 = vrot.slane %v114, 4
    %v116 = vadd.f32 %v114, %v115
    %v117 = vrot.slane %v116, 2
    %v118 = vadd.f32 %v116, %v117
    %v119 = vrot.slane %v118, 1
    %v120 = vadd.f32 %v118, %v119
    %v121 = vsel %vm70, %v100, 0.0
    %v122 = vrot.slane %v121, 4
    %v123 = vadd.f32 %v121, %v122
    %v124 = vrot.slane %v123, 2
    %v125 = vadd.f32 %v123, %v124
    %v126 = vrot.slane %v125, 1
    %v127 = vadd.f32 %v125, %v126
    %v128 = vsel %vm70, %v104, 0.0
    %v129 = vrot.slane %v128, 4
    %v130 = vadd.f32 %v128, %v129
    %v131 = vrot.slane %v130, 2
    %v132 = vadd.f32 %v130, %v131
    %v133 = vrot.slane %v132, 1
    %v134 = vadd.f32 %v132, %v133
    %v135 = vmul.f32 %v60, %v60
    %v136 = vmul.f32 %v61, %v61
    %v139 = vcombine.high %v135, %v135
    %v140 = vcombine.high %v136, %v136
    %v143 = vsel %vm70, %v135, 0.0
    %v144 = vrot.slane %v143, 4
    %v145 = vadd.f32 %v143, %v144
    %v146 = vrot.slane %v145, 2
    %v147 = vadd.f32 %v145, %v146
    %v148 = vrot.slane %v147, 1
    %v149 = vadd.f32 %v147, %v148
    %v150 = vsel %vm70, %v139, 0.0
    %v151 = vrot.slane %v150, 4
    %v152 = vadd.f32 %v150, %v151
    %v153 = vrot.slane %v152, 2
    %v154 = vadd.f32 %v152, %v153
    %v155 = vrot.slane %v154, 1
    %v156 = vadd.f32 %v154, %v155
    %v157 = vsel %vm70, %v136, 0.0
    %v158 = vrot.slane %v157, 4
    %v159 = vadd.f32 %v157, %v158
    %v160 = vrot.slane %v159, 2
    %v161 = vadd.f32 %v159, %v160
    %v162 = vrot.slane %v161, 1
    %v163 = vadd.f32 %v161, %v162
    %v164 = vsel %vm70, %v140, 0.0
    %v165 = vrot.slane %v164, 4
    %v166 = vadd.f32 %v164, %v165
    %v167 = vrot.slane %v166, 2
    %v168 = vadd.f32 %v166, %v167
    %v169 = vrot.slane %v168, 1
    %v170 = vadd.f32 %v168, %v169
    %v171 = vrsqrt.pop %v77
    %v172 = vmul.f32 %v77, %v171
    %vm173 = vcmp.eq.f32.partialorder %v77, inf
    %v174 = vsel %vm173, %v77, %v172
    %vm175 = vcmp.eq.f32.partialorder %v77, 0.0
    %v176 = vand.u32 %v77, 2147483648
    %v177 = vsel %vm175, %v176, %v174
    %v178 = vrsqrt.pop %v84
    %v179 = vmul.f32 %v84, %v178
    %vm180 = vcmp.eq.f32.partialorder %v84, inf
    %v181 = vsel %vm180, %v84, %v179
    %vm182 = vcmp.eq.f32.partialorder %v84, 0.0
    %v183 = vand.u32 %v84, 2147483648
    %v184 = vsel %vm182, %v183, %v181
    %v185 = vrsqrt.pop %v91
    %v186 = vmul.f32 %v91, %v185
    %vm187 = vcmp.eq.f32.partialorder %v91, inf
    %v188 = vsel %vm187, %v91, %v186
    %vm189 = vcmp.eq.f32.partialorder %v91, 0.0
    %v190 = vand.u32 %v91, 2147483648
    %v191 = vsel %vm189, %v190, %v188
    %v192 = vrsqrt.pop %v98
    %v193 = vmul.f32 %v98, %v192
    %vm194 = vcmp.eq.f32.partialorder %v98, inf
    %v195 = vsel %vm194, %v98, %v193
    %vm196 = vcmp.eq.f32.partialorder %v98, 0.0
    %v197 = vand.u32 %v98, 2147483648
    %v198 = vsel %vm196, %v197, %v195
    %v199 = vrsqrt.pop %v113
    %v200 = vmul.f32 %v113, %v199
    %vm201 = vcmp.eq.f32.partialorder %v113, inf
    %v202 = vsel %vm201, %v113, %v200
    %vm203 = vcmp.eq.f32.partialorder %v113, 0.0
    %v204 = vand.u32 %v113, 2147483648
    %v205 = vsel %vm203, %v204, %v202
    %v206 = vrsqrt.pop %v120
    %v207 = vmul.f32 %v120, %v206
    %vm208 = vcmp.eq.f32.partialorder %v120, inf
    %v209 = vsel %vm208, %v120, %v207
    %vm210 = vcmp.eq.f32.partialorder %v120, 0.0
    %v211 = vand.u32 %v120, 2147483648
    %v212 = vsel %vm210, %v211, %v209
    %v213 = vrsqrt.pop %v127
    %v214 = vmul.f32 %v127, %v213
    %vm215 = vcmp.eq.f32.partialorder %v127, inf
    %v216 = vsel %vm215, %v127, %v214
    %vm217 = vcmp.eq.f32.partialorder %v127, 0.0
    %v218 = vand.u32 %v127, 2147483648
    %v219 = vsel %vm217, %v218, %v216
    %v220 = vrsqrt.pop %v134
    %v221 = vmul.f32 %v134, %v220
    %vm222 = vcmp.eq.f32.partialorder %v134, inf
    %v223 = vsel %vm222, %v134, %v221
    %vm224 = vcmp.eq.f32.partialorder %v134, 0.0
    %v225 = vand.u32 %v134, 2147483648
    %v226 = vsel %vm224, %v225, %v223
    %v227 = vrsqrt.pop %v149
    %v228 = vmul.f32 %v149, %v227
    %vm229 = vcmp.eq.f32.partialorder %v149, inf
    %v230 = vsel %vm229, %v149, %v228
    %vm231 = vcmp.eq.f32.partialorder %v149, 0.0
    %v232 = vand.u32 %v149, 2147483648
    %v233 = vsel %vm231, %v232, %v230
    %v234 = vrsqrt.pop %v156
    %v235 = vmul.f32 %v156, %v234
    %vm236 = vcmp.eq.f32.partialorder %v156, inf
    %v237 = vsel %vm236, %v156, %v235
    %vm238 = vcmp.eq.f32.partialorder %v156, 0.0
    %v239 = vand.u32 %v156, 2147483648
    %v240 = vsel %vm238, %v239, %v237
    %v241 = vrsqrt.pop %v163
    %v242 = vmul.f32 %v163, %v241
    %vm243 = vcmp.eq.f32.partialorder %v163, inf
    %v244 = vsel %vm243, %v163, %v242
    %vm245 = vcmp.eq.f32.partialorder %v163, 0.0
    %v246 = vand.u32 %v163, 2147483648
    %v247 = vsel %vm245, %v246, %v244
    %v248 = vrsqrt.pop %v170
    %v249 = vmul.f32 %v170, %v248
    %vm250 = vcmp.eq.f32.partialorder %v170, inf
    %v251 = vsel %vm250, %v170, %v249
    %vm252 = vcmp.eq.f32.partialorder %v170, 0.0
    %v253 = vand.u32 %v170, 2147483648
    %v254 = vsel %vm252, %v253, %v251
    %v255 = vadd.f32 %v177, %v205
    %v256 = vadd.f32 %v184, %v212
    %v257 = vadd.f32 %v191, %v219
    %v258 = vadd.f32 %v198, %v226
    %v259 = vadd.f32 %v255, %v233
    %v260 = vadd.f32 %v256, %v240
    %v261 = vadd.f32 %v257, %v247
    %v262 = vadd.f32 %v258, %v254
    %v263 = vmul.f32 %v259, 0.5
    %v264 = vmul.f32 %v260, 0.5
    %v265 = vmul.f32 %v261, 0.5
    %v266 = vmul.f32 %v262, 0.5
    %v267 = vsub.f32 %v263, %v177
    %v268 = vsub.f32 %v264, %v184
    %v269 = vsub.f32 %v265, %v191
    %v270 = vsub.f32 %v266, %v198
    %v271 = vmul.f32 %v263, %v267
    %v272 = vmul.f32 %v264, %v268
    %v273 = vmul.f32 %v265, %v269
    %v274 = vmul.f32 %v266, %v270
    %v275 = vsub.f32 %v263, %v205
    %v276 = vsub.f32 %v264, %v212
    %v277 = vsub.f32 %v265, %v219
    %v278 = vsub.f32 %v266, %v226
    %v279 = vmul.f32 %v271, %v275
    %v280 = vmul.f32 %v272, %v276
    %v281 = vmul.f32 %v273, %v277
    %v282 = vmul.f32 %v274, %v278
    %v283 = vsub.f32 %v263, %v233
    %v284 = vsub.f32 %v264, %v240
    %v285 = vsub.f32 %v265, %v247
    %v286 = vsub.f32 %v266, %v254
    %v287 = vmul.f32 %v279, %v283
    %v288 = vmul.f32 %v280, %v284
    %v289 = vmul.f32 %v281, %v285
    %v290 = vmul.f32 %v282, %v286
    %vm291 = vcmp.gt.f32.partialorder %v287, 0.0
    %vm292 = vcmp.gt.f32.partialorder %v288, 0.0
    %vm293 = vcmp.gt.f32.partialorder %v289, 0.0
    %vm294 = vcmp.gt.f32.partialorder %v290, 0.0
    %v295 = vrsqrt.pop %v287
    %v296 = vrsqrt.pop %v288
    %v297 = vrsqrt.pop %v289
    %v298 = vrsqrt.pop %v290
    %v299 = vmul.f32 %v295, 0.125
    %v300 = vmul.f32 %v296, 0.125
    %v301 = vmul.f32 %v297, 0.125
    %v302 = vmul.f32 %v298, 0.125
    %v303 = vsel %vm291, %v299, 0.25
    %v304 = vsel %vm292, %v300, 0.25
    %v305 = vsel %vm293, %v301, 0.25
    %v306 = vsel %vm294, %v302, 0.25
    %v307 = vadd.f32 %v113, %v149
    %v308 = vadd.f32 %v120, %v156
    %v309 = vadd.f32 %v127, %v163
    %v310 = vadd.f32 %v134, %v170
    %v311 = vsub.f32 %v307, %v77
    %v312 = vsub.f32 %v308, %v84
    %v313 = vsub.f32 %v309, %v91
    %v314 = vsub.f32 %v310, %v98
    %v315 = vmul.f32 %v311, %v303
    %v316 = vmul.f32 %v312, %v304
    %v317 = vmul.f32 %v313, %v305
    %v318 = vmul.f32 %v314, %v306
    %v323 = vcombine.low %v315, %v316
    %v324 = vcombine.low %v317, %v318
    %v326 = vunpack.c.l.s4 1966171168
    %v327 = vunpack.c.0.s8 %v326
    %v328 = vlaneseq
    %v329 = vshrl.u32 %v328, 7
    %v330 = vsub.s32 %v327, %v329
    %v331 = vrot.slane %v323, %v330
    %v333 = vunpack.c.l.s4 1966171168
    %v334 = vunpack.c.0.s8 %v333
    %v335 = vlaneseq
    %v336 = vshrl.u32 %v335, 7
    %v337 = vsub.s32 %v334, %v336
    %v338 = vrot.slane %v324, %v337
    %v339 = vcombine.low %v331, %v338
    %v341 = vunpack.c.l.s4 1966171168
    %v342 = vunpack.c.0.s8 %v341
    %v343 = vlaneseq
    %v344 = vshrl.u32 %v343, 7
    %v345 = vsub.s32 %v342, %v344
    %v346 = vrot.slane %v339, %v345
    %v348 = vlaneseq
    %vm349 = vcmp.ge.s32.totalorder %v348, 0
    %vm350 = vcmp.lt.s32.totalorder %v348, 512
    %vm351 = vmand %vm349, %vm350
    %352 = vst.msk [vmem:[#allocation8] ss:$4 sm:$0xf] %vm351, %v346
    %v353 = vadd.f32 %v77, %v149
    %v354 = vadd.f32 %v84, %v156
    %v355 = vadd.f32 %v91, %v163
    %v356 = vadd.f32 %v98, %v170
    %v357 = vsub.f32 %v353, %v113
    %v358 = vsub.f32 %v354, %v120
    %v359 = vsub.f32 %v355, %v127
    %v360 = vsub.f32 %v356, %v134
    %v361 = vmul.f32 %v357, %v303
    %v362 = vmul.f32 %v358, %v304
    %v363 = vmul.f32 %v359, %v305
    %v364 = vmul.f32 %v360, %v306
    %v369 = vcombine.low %v361, %v362
    %v370 = vcombine.low %v363, %v364
    %v372 = vunpack.c.l.s4 1966171168
    %v373 = vunpack.c.0.s8 %v372
    %v374 = vlaneseq
    %v375 = vshrl.u32 %v374, 7
    %v376 = vsub.s32 %v373, %v375
    %v377 = vrot.slane %v369, %v376
    %v379 = vunpack.c.l.s4 1966171168
    %v380 = vunpack.c.0.s8 %v379
    %v381 = vlaneseq
    %v382 = vshrl.u32 %v381, 7
    %v383 = vsub.s32 %v380, %v382
    %v384 = vrot.slane %v370, %v383
    %v385 = vcombine.low %v377, %v384
    %v387 = vunpack.c.l.s4 1966171168
    %v388 = vunpack.c.0.s8 %v387
    %v389 = vlaneseq
    %v390 = vshrl.u32 %v389, 7
    %v391 = vsub.s32 %v388, %v390
    %v392 = vrot.slane %v385, %v391
    %s394 = scalar_lea.vmem [#allocation8], 1
    %395 = vst.msk [vmem:[%s394] ss:$4 sm:$0xf] %vm351, %v392
    %v396 = vadd.f32 %v77, %v113
    %v397 = vadd.f32 %v84, %v120
    %v398 = vadd.f32 %v91, %v127
    %v399 = vadd.f32 %v98, %v134
    %v400 = vsub.f32 %v396, %v149
    %v401 = vsub.f32 %v397, %v156
    %v402 = vsub.f32 %v398, %v163
    %v403 = vsub.f32 %v399, %v170
    %v404 = vmul.f32 %v400, %v303
    %v405 = vmul.f32 %v401, %v304
    %v406 = vmul.f32 %v402, %v305
    %v407 = vmul.f32 %v403, %v306
    %v412 = vcombine.low %v404, %v405
    %v413 = vcombine.low %v406, %v407
    %v415 = vunpack.c.l.s4 1966171168
    %v416 = vunpack.c.0.s8 %v415
    %v417 = vlaneseq
    %v418 = vshrl.u32 %v417, 7
    %v419 = vsub.s32 %v416, %v418
    %v420 = vrot.slane %v412, %v419
    %v422 = vunpack.c.l.s4 1966171168
    %v423 = vunpack.c.0.s8 %v422
    %v424 = vlaneseq
    %v425 = vshrl.u32 %v424, 7
    %v426 = vsub.s32 %v423, %v425
    %v427 = vrot.slane %v413, %v426
    %v428 = vcombine.low %v420, %v427
    %v430 = vunpack.c.l.s4 1966171168
    %v431 = vunpack.c.0.s8 %v430
    %v432 = vlaneseq
    %v433 = vshrl.u32 %v432, 7
    %v434 = vsub.s32 %v431, %v433
    %v435 = vrot.slane %v428, %v434
    %s437 = scalar_lea.vmem [#allocation8], 2
    %438 = vst.msk [vmem:[%s437] ss:$4 sm:$0xf] %vm351, %v435
    // Predicated region
    $region26: #{tpu_custom_call.1} parent=1 // pred_check
      _
    $region27: #{tpu_custom_call.1} parent=1 // pred_check_branch
      %440 = sbr.rel (0) target = $region29
    $region28: #{tpu_custom_call.1} parent=1 // pred_region
      %s442 = ssub.s32 256, 256
      %443 = vsyncadd [#allocation4], %s442
      %s445 = sshll.u32 [#allocation8], 4
      %s446 = int_to_ptr.vmem [resolvable:$true] %s445
      %448 = dma.vmem_to_hbm [thread:$0]  %s446, 256, %s3, [#allocation4]
    $region29: #{tpu_custom_call.1} parent=1 // pred_fallthru
      _
    // Predicated region
    $region30: #{tpu_custom_call.1} parent=1 // pred_check
      _
    $region31: #{tpu_custom_call.1} parent=1 // pred_check_branch
      %450 = sbr.rel (0) target = $region33
    $region32: #{tpu_custom_call.1} parent=1 // pred_region
      %451 = dma.done [#allocation4], 256
    $region33: #{tpu_custom_call.1} parent=1 // pred_fallthru
      _
    %452 = vsyncpa [#allocation3], 1
    %453 = vsyncpa [#allocation6], 1
    %454 = vsyncpa [#allocation4], 1

</llo_original>
